<compile_context>
chip_gen: v7x
topology: tpu7x:2x2x1
jax: 0.10.0
libtpu: 0.0.40
codegen_flags: <defaults>
</compile_context>

<pallas_src>
import numpy as np
import jax
import jax.numpy as jnp
from jax import lax
from jax.experimental import pallas as pl
from jax.experimental.pallas import tpu as pltpu

_LANES = 128          # vreg lane width (fast axis)
_SUBLANES = 8         # f32 sublane count
_MAX_BLOCK_ROWS = 1024  # (1024,128) f32 tile = 512 KiB/operand -> safe on v7x 64 MiB VMEM


def _mul_erf_kernel(x_ref, inv_c_ref, o_ref):
    # One EUP op per element (erf); the divide was pre-folded into a VPU multiply.
    o_ref[...] = lax.erf(x_ref[...] * inv_c_ref[...])


def _round_up(n: int, m: int) -> int:
    return ((n + m - 1) // m) * m


def div_erf(x: jax.Array, c1: jax.Array) -> jax.Array:
    """erf(x / c1) with numpy-style broadcasting, as a lane-dense Pallas kernel."""
    out_shape = jnp.broadcast_shapes(x.shape, c1.shape)
    dtype = x.dtype

    # Fold the constant divide into a reciprocal multiply (computed once here).
    inv_c = (jnp.float32(1.0) / c1).astype(dtype)

    # Lane-dense presentation: flatten to (rows, 128) and zero-pad.
    # Padding is inert: erf(0 * 0) == 0, and padded lanes are sliced off below.
    xf = jnp.broadcast_to(x, out_shape).reshape(-1)
    cf = jnp.broadcast_to(inv_c, out_shape).reshape(-1)
    total = int(xf.size)

    rows_needed = max(1, -(-total // _LANES))
    if rows_needed <= _MAX_BLOCK_ROWS:
        rows = _round_up(rows_needed, _SUBLANES)
        block_rows = rows
    else:
        block_rows = _MAX_BLOCK_ROWS
        rows = _round_up(rows_needed, block_rows)

    padded = rows * _LANES
    xf = jnp.pad(xf, (0, padded - total))
    cf = jnp.pad(cf, (0, padded - total))
    x2 = xf.reshape(rows, _LANES)
    c2 = cf.reshape(rows, _LANES)

    if rows == block_rows:
        # Tiny / single-tile case: no grid, whole arrays resident in VMEM.
        out2 = pl.pallas_call(
            _mul_erf_kernel,
            out_shape=jax.ShapeDtypeStruct((rows, _LANES), dtype),
            in_specs=[
                pl.BlockSpec(memory_space=pltpu.MemorySpace.VMEM),
                pl.BlockSpec(memory_space=pltpu.MemorySpace.VMEM),
            ],
            out_specs=pl.BlockSpec(memory_space=pltpu.MemorySpace.VMEM),
        )(x2, c2)
    else:
        # Scaled-up case: 1-D grid over lane-dense row tiles; "parallel" lets
        # v7x split the grid across its two TensorCores.
        out2 = pl.pallas_call(
            _mul_erf_kernel,
            out_shape=jax.ShapeDtypeStruct((rows, _LANES), dtype),
            grid=(rows // block_rows,),
            in_specs=[
                pl.BlockSpec((block_rows, _LANES), lambda i: (i, 0)),
                pl.BlockSpec((block_rows, _LANES), lambda i: (i, 0)),
            ],
            out_specs=pl.BlockSpec((block_rows, _LANES), lambda i: (i, 0)),
            compiler_params=pltpu.CompilerParams(
                dimension_semantics=("parallel",),
                vmem_limit_bytes=32 * 1024 * 1024,
            ),
        )(x2, c2)

    return out2.reshape(-1)[:total].reshape(out_shape)


def make_params() -> jax.Array:
    # Deterministic parameter init, matching the module's __init__ exactly.
    rng = np.random.default_rng(seed=123)
    c1 = rng.random((1, 2, 3, 3), dtype=np.float32) + 1.0
    return jnp.asarray(c1)


if __name__ == "__main__":
    c1 = make_params()                                           # (1, 2, 3, 3) f32
    key = jax.random.PRNGKey(0)
    x = jax.random.normal(key, (2, 2, 3, 3), dtype=jnp.float32)  # batch=2, NCHW

    out = jax.block_until_ready(div_erf(x, c1))

    # Reference check (plain JAX) — same semantics as torch.erf(torch.div(x, C1)).
    ref = jax.scipy.special.erf(x / c1)
    assert out.shape == ref.shape and out.dtype == ref.dtype
    np.testing.assert_allclose(np.asarray(out), np.asarray(ref), rtol=1e-6, atol=2e-6)

    print("KERNEL_OK")
</pallas_src>

<mosaic_0001>
module attributes {stable_mosaic.version = 11 : i64} {
  func.func @_mul_erf_kernel(%arg0: memref<8x128xf32, #tpu.memory_space<vmem>>, %arg1: memref<8x128xf32, #tpu.memory_space<vmem>>, %arg2: memref<8x128xf32, #tpu.memory_space<vmem>>) attributes {dimension_semantics = [], scalar_prefetch = 0 : i64, scratch_operands = 0 : i64, tpu.core_type = #tpu.core_type<tc>} {
    %c0 = arith.constant 0 : index
    %c0_0 = arith.constant 0 : index
    %0 = vector.load %arg0[%c0, %c0_0] : memref<8x128xf32, #tpu.memory_space<vmem>>, vector<8x128xf32>
    %c0_1 = arith.constant 0 : index
    %c0_2 = arith.constant 0 : index
    %1 = vector.load %arg1[%c0_1, %c0_2] : memref<8x128xf32, #tpu.memory_space<vmem>>, vector<8x128xf32>
    %2 = arith.mulf %0, %1 : vector<8x128xf32>
    %3 = math.erf %2 : vector<8x128xf32>
    %c0_3 = arith.constant 0 : index
    %c0_4 = arith.constant 0 : index
    %4 = vector.load %arg2[%c0_3, %c0_4] : memref<8x128xf32, #tpu.memory_space<vmem>>, vector<8x128xf32>
    tpu.vector_store %arg2[%c0_3, %c0_4], %3 {strides = array<i32>} : memref<8x128xf32, #tpu.memory_space<vmem>>, vector<8x128xf32>,
    return
  }
}

</mosaic_0001>

<llo_original>
// kernel: tpu_custom_call.1
$region0: #{tpu_custom_call.1}
  #allocation0 [shape = 'u32[]', space=smem, size = 0x4, offset = 0x4, fixed_abs, tag = 'smem constant byte address 0x4 - core index']
  #allocation1 [shape = 'u32[144,128]{1,0:T(1,128)}', space=vmem, size = 0x12000, scoped, tag = 'internal scratch']
  %s0 = inlined_call_operand.hbm [shape: f32[8,128], index: 0, kind: input, shape index: {}]
  %s1 = inlined_call_operand.hbm [shape: f32[8,128], index: 1, kind: input, shape index: {}]
  %s2 = inlined_call_operand.hbm [shape: f32[8,128], index: 2, kind: output, shape index: {}]
  %s3 = sld [smem:[#allocation0]]
  $region26: #{tpu_custom_call.1} parent=0
    _
  %s5 = ssub.s32 1, %s3
  %s6 = scalar_select 0, %s5, %s3
  $region1: #{tpu_custom_call.1} parent=0
    #allocation2 [shape = 'u8[4096]{0}', space=vmem, size = 0x1000, scoped, tag = 'input window, operand 0, single buffered']
    #allocation3 [shape = 's32[1]{0}', space=sflag, size = 0x4, scoped, tag = 'scoped memory for tpu_custom_call.1']
    #allocation4 [shape = 's32[1]{0}', space=sflag, size = 0x4, scoped, tag = 'scoped memory for tpu_custom_call.1']
    #allocation5 [shape = 'u8[4096]{0}', space=vmem, size = 0x1000, scoped, tag = 'input window, operand 1, single buffered']
    #allocation6 [shape = 's32[1]{0}', space=sflag, size = 0x4, scoped, tag = 'scoped memory for tpu_custom_call.1']
    #allocation7 [shape = 'u8[4096]{0}', space=vmem, size = 0x1000, scoped, tag = 'output window, operand 0, single buffered']
    %7 = vsyncpa [#allocation3], 0
    %8 = vsyncpa [#allocation6], 0
    %9 = vsyncpa [#allocation4], 0
    // Predicated region
    $region2: #{tpu_custom_call.1} parent=1 // pred_check
      _
    $region3: #{tpu_custom_call.1} parent=1 // pred_check_branch
      %11 = sbr.rel (0) target = $region5
    $region4: #{tpu_custom_call.1} parent=1 // pred_region
      %s13 = ssub.s32 128, 128
      %14 = vsyncadd [#allocation3], %s13
      %s16 = sshll.u32 [#allocation2], 4
      %s17 = int_to_ptr.vmem [resolvable:$true] %s16
      %19 = dma.hbm_to_vmem [thread:$0]  %s0, 128, %s17, [#allocation3]
    $region5: #{tpu_custom_call.1} parent=1 // pred_fallthru
      _
    // Predicated region
    $region6: #{tpu_custom_call.1} parent=1 // pred_check
      _
    $region7: #{tpu_custom_call.1} parent=1 // pred_check_branch
      %21 = sbr.rel (0) target = $region9
    $region8: #{tpu_custom_call.1} parent=1 // pred_region
      %s23 = ssub.s32 128, 128
      %24 = vsyncadd [#allocation6], %s23
      %s26 = sshll.u32 [#allocation5], 4
      %s27 = int_to_ptr.vmem [resolvable:$true] %s26
      %29 = dma.hbm_to_vmem [thread:$0]  %s1, 128, %s27, [#allocation6]
    $region9: #{tpu_custom_call.1} parent=1 // pred_fallthru
      _
    // Predicated region
    $region10: #{tpu_custom_call.1} parent=1 // pred_check
      _
    $region11: #{tpu_custom_call.1} parent=1 // pred_check_branch
      %31 = sbr.rel (0) target = $region13
    $region12: #{tpu_custom_call.1} parent=1 // pred_region
      %32 = dma.done [#allocation3], 128
    $region13: #{tpu_custom_call.1} parent=1 // pred_fallthru
      _
    // Predicated region
    $region14: #{tpu_custom_call.1} parent=1 // pred_check
      _
    $region15: #{tpu_custom_call.1} parent=1 // pred_check_branch
      %34 = sbr.rel (0) target = $region17
    $region16: #{tpu_custom_call.1} parent=1 // pred_region
      %35 = dma.done [#allocation6], 128
    $region17: #{tpu_custom_call.1} parent=1 // pred_fallthru
      _
    %v36 = vld [vmem:[#allocation2] sm:$0xff]
    %v37 = vld [vmem:[#allocation5] sm:$0xff]
    %v38 = vmul.f32 %v36, %v37
    %v39 = verf.f32.pop %v38
    %40 = vst [vmem:[#allocation7] sm:$0xff] %v39
    // Predicated region
    $region18: #{tpu_custom_call.1} parent=1 // pred_check
      _
    $region19: #{tpu_custom_call.1} parent=1 // pred_check_branch
      %42 = sbr.rel (0) target = $region21
    $region20: #{tpu_custom_call.1} parent=1 // pred_region
      %s44 = ssub.s32 128, 128
      %45 = vsyncadd [#allocation4], %s44
      %s47 = sshll.u32 [#allocation7], 4
      %s48 = int_to_ptr.vmem [resolvable:$true] %s47
      %50 = dma.vmem_to_hbm [thread:$0]  %s48, 128, %s2, [#allocation4]
    $region21: #{tpu_custom_call.1} parent=1 // pred_fallthru
      _
    // Predicated region
    $region22: #{tpu_custom_call.1} parent=1 // pred_check
      _
    $region23: #{tpu_custom_call.1} parent=1 // pred_check_branch
      %52 = sbr.rel (0) target = $region25
    $region24: #{tpu_custom_call.1} parent=1 // pred_region
      %53 = dma.done [#allocation4], 128
    $region25: #{tpu_custom_call.1} parent=1 // pred_fallthru
      _
    %54 = vsyncpa [#allocation3], 1
    %55 = vsyncpa [#allocation6], 1
    %56 = vsyncpa [#allocation4], 1

</llo_original>
